<compile_context>
chip_gen: v7x
topology: tpu7x:2x2x1
jax: 0.10.0
libtpu: 0.0.40
codegen_flags: <defaults>
</compile_context>

<pallas_src>
import jax
import jax.numpy as jnp
from jax.experimental import pallas as pl
from jax.experimental.pallas import tpu as pltpu

LANE = 128
TB_MAX = 128  # batch-tile cap keeps the one-hot + activations well inside vregs/VMEM


def _round_up(x: int, m: int) -> int:
    return (x + m - 1) // m * m


def _cdiv(a: int, b: int) -> int:
    return -(-a // b)


def mlp_kernel(ids_ref, cw1_ref, b1_ref, w2_ref, b2_ref, out_ref):
    # ids_ref : (tb, T)      int32   token ids for this batch tile
    # cw1_ref : (T*Vp, Hp)   bf16    blockdiag(C) @ W1, vocab/hidden padded
    # b1_ref  : (1, Hp)      f32     zero-padded
    # w2_ref  : (Hp, Vp)     bf16    zero-padded rows/cols
    # b2_ref  : (1, Vp)      f32     zero-padded
    # out_ref : (tb, Vp)     f32
    tb, T = ids_ref.shape
    tvp, _ = cw1_ref.shape
    Vp = tvp // T

    ids = ids_ref[...]  # (tb, T) int32

    # Fused embedding gather + first projection: per-position lane-dense
    # one-hot chunks (tb, Vp) concatenated along lanes, then one bf16 MXU
    # matmul against the precomputed blockdiag(C) @ W1.
    col = jax.lax.broadcasted_iota(jnp.int32, (tb, Vp), 1)  # (tb, 128)
    parts = [(col == ids[:, t:t + 1]).astype(jnp.bfloat16) for t in range(T)]
    onehot = jnp.concatenate(parts, axis=1)  # (tb, T*Vp) bf16

    z1 = jnp.dot(onehot, cw1_ref[...],
                 preferred_element_type=jnp.float32) + b1_ref[...]  # (tb, Hp) f32
    h = jnp.tanh(z1)  # f32 epilogue (no bf16 VPU/EUP on v5e)

    # Output layer: bf16 MXU operands, f32 accumulate, lane-dense padded vocab.
    logits = jnp.dot(h.astype(jnp.bfloat16), w2_ref[...],
                     preferred_element_type=jnp.float32) + b2_ref[...]
    out_ref[...] = logits


@jax.jit
def mlp_forward(inputs, C, W1, b1, W2, b2):
    """inputs: (B, block_size) int token ids. Returns (B, vocab) f32 logits."""
    B, T = inputs.shape
    V, E = C.shape
    K, H = W1.shape  # K == T * E
    assert K == T * E
    Vp = _round_up(V, LANE)
    Hp = _round_up(H, LANE)

    # ---- wrapper-side weight shaping (tiny, layout-only + one small matmul) ----
    # CW1[t*Vp + v, :H] = C[v, :] @ W1[t*E:(t+1)*E, :]  (blockdiag(C) @ W1).
    CW1 = jnp.zeros((T * Vp, Hp), jnp.float32)
    for t in range(T):
        part = jnp.dot(C, W1[t * E:(t + 1) * E, :],
                       preferred_element_type=jnp.float32)  # (V, H)
        CW1 = CW1.at[t * Vp:t * Vp + V, :H].set(part)
    CW1_b = CW1.astype(jnp.bfloat16)

    b1_p = jnp.zeros((1, Hp), jnp.float32).at[:, :H].set(b1.reshape(1, H))
    W2_p = jnp.zeros((Hp, Vp), jnp.bfloat16).at[:H, :V].set(W2.astype(jnp.bfloat16))
    b2_p = jnp.zeros((1, Vp), jnp.float32).at[:, :V].set(b2.reshape(1, V))

    # ---- batch tiling: minimal padding, >= 2 grid steps for v7x's 2 TCs ----
    nb = _cdiv(B, TB_MAX)
    if B > 16:
        nb = max(nb, 2)
    tb = _round_up(_cdiv(B, nb), 8)
    Bp = nb * tb

    ids = inputs.astype(jnp.int32)
    if Bp != B:
        ids = jnp.pad(ids, ((0, Bp - B), (0, 0)))  # pad rows use token 0

    out = pl.pallas_call(
        mlp_kernel,
        out_shape=jax.ShapeDtypeStruct((Bp, Vp), jnp.float32),
        grid=(nb,),
        in_specs=[
            pl.BlockSpec((tb, T), lambda i: (i, 0)),          # ids: tiled over batch
            pl.BlockSpec((T * Vp, Hp), lambda i: (0, 0)),     # CW1: resident
            pl.BlockSpec((1, Hp), lambda i: (0, 0)),          # b1: resident
            pl.BlockSpec((Hp, Vp), lambda i: (0, 0)),         # W2: resident
            pl.BlockSpec((1, Vp), lambda i: (0, 0)),          # b2: resident
        ],
        out_specs=pl.BlockSpec((tb, Vp), lambda i: (i, 0)),
        compiler_params=pltpu.CompilerParams(
            dimension_semantics=("parallel",)),
    )(ids, CW1_b, b1_p, W2_p, b2_p)

    return out[:B, :V]


def init_params(key, vocab_size, embedding_size, block_size, hidden_layer_size):
    kc, kw1, kb1, kw2, kb2 = jax.random.split(key, 5)
    C = jax.random.normal(kc, (vocab_size, embedding_size), jnp.float32)
    W1 = jax.random.normal(
        kw1, (block_size * embedding_size, hidden_layer_size), jnp.float32
    )
    b1 = jax.random.normal(kb1, (hidden_layer_size,), jnp.float32)
    W2 = jax.random.normal(kw2, (hidden_layer_size, vocab_size), jnp.float32)
    b2 = jax.random.normal(kb2, (vocab_size,), jnp.float32)
    return C, W1, b1, W2, b2


if __name__ == "__main__":
    # Shapes consistent with forward's hardcoded .view((-1, 6)):
    # block_size * embedding_size == 6  ->  block_size=3, embedding_size=2.
    vocab_size = 27
    embedding_size = 2
    block_size = 3
    hidden_layer_size = 32
    batch = 8

    key = jax.random.PRNGKey(0)
    kparams, kinput = jax.random.split(key)
    C, W1, b1, W2, b2 = init_params(
        kparams, vocab_size, embedding_size, block_size, hidden_layer_size
    )
    inputs = jax.random.randint(
        kinput, (batch, block_size), 0, vocab_size, dtype=jnp.int32
    )

    logits = mlp_forward(inputs, C, W1, b1, W2, b2)
    jax.block_until_ready(logits)
    assert logits.shape == (batch, vocab_size)

    # Reference 1: mirrors the kernel's rounding points (per-position C@W1
    # partials rounded to bf16, f32 sum, f32 tanh, bf16 W2 operands, f32 acc).
    E = embedding_size
    parts = [
        jnp.dot(C, W1[t * E:(t + 1) * E, :], preferred_element_type=jnp.float32)
        .astype(jnp.bfloat16).astype(jnp.float32)
        for t in range(block_size)
    ]
    z1_ref = sum(parts[t][inputs[:, t]] for t in range(block_size)) + b1
    h_ref = jnp.tanh(z1_ref)
    ref_bf16 = jnp.dot(h_ref.astype(jnp.bfloat16), W2.astype(jnp.bfloat16),
                       preferred_element_type=jnp.float32) + b2
    assert jnp.allclose(logits, ref_bf16, atol=5e-2, rtol=5e-2), "bf16-ref mismatch"

    # Reference 2: pure-f32 torch semantics (loose, bf16 MXU quantization noise).
    emb = C[inputs].reshape(batch, block_size * embedding_size)
    h32 = jnp.tanh(emb @ W1 + b1)
    ref_f32 = h32 @ W2 + b2
    assert jnp.allclose(logits, ref_f32, atol=3e-1, rtol=1e-1), "f32-ref mismatch"

    print("KERNEL_OK")
</pallas_src>

<mosaic_0001>
module attributes {stable_mosaic.version = 11 : i64} {
  func.func @mlp_kernel(%arg0: i32, %arg1: memref<8x3xi32, #tpu.memory_space<vmem>>, %arg2: memref<384x128xbf16, #tpu.memory_space<vmem>>, %arg3: memref<1x128xf32, #tpu.memory_space<vmem>>, %arg4: memref<128x128xbf16, #tpu.memory_space<vmem>>, %arg5: memref<1x128xf32, #tpu.memory_space<vmem>>, %arg6: memref<8x128xf32, #tpu.memory_space<vmem>>) attributes {dimension_semantics = [#tpu.dimension_semantics<parallel>], iteration_bounds = array<i64: 1>, scalar_prefetch = 0 : i64, scratch_operands = 0 : i64, tpu.core_type = #tpu.core_type<tc>, window_params = [{transform_indices = @transform_0, window_bounds = array<i64: 8, 3>}, {pipeline_mode = #tpu.pipeline_mode<synchronous>, transform_indices = @transform_1, window_bounds = array<i64: 384, 128>}, {pipeline_mode = #tpu.pipeline_mode<synchronous>, transform_indices = @transform_2, window_bounds = array<i64: 1, 128>}, {pipeline_mode = #tpu.pipeline_mode<synchronous>, transform_indices = @transform_3, window_bounds = array<i64: 128, 128>}, {pipeline_mode = #tpu.pipeline_mode<synchronous>, transform_indices = @transform_4, window_bounds = array<i64: 1, 128>}, {transform_indices = @transform_5, window_bounds = array<i64: 8, 128>}]} {
    %c0 = arith.constant 0 : index
    %c0_0 = arith.constant 0 : index
    %0 = vector.load %arg1[%c0, %c0_0] : memref<8x3xi32, #tpu.memory_space<vmem>>, vector<8x3xi32>
    %1 = tpu.iota {dimensions = array<i32: 1>} : vector<8x128xi32>
    %2 = vector.extract_strided_slice %0 {offsets = [0, 0], sizes = [8, 1], strides = [1, 1]} : vector<8x3xi32> to vector<8x1xi32>
    %3 = vector.broadcast %2 : vector<8x1xi32> to vector<8x128xi32>
    %4 = arith.cmpi eq, %1, %3 : vector<8x128xi32>
    %5 = arith.extui %4 : vector<8x128xi1> to vector<8x128xi32>
    %6 = arith.sitofp %5 : vector<8x128xi32> to vector<8x128xf32>
    %7 = arith.truncf %6 : vector<8x128xf32> to vector<8x128xbf16>
    %8 = vector.extract_strided_slice %0 {offsets = [0, 1], sizes = [8, 1], strides = [1, 1]} : vector<8x3xi32> to vector<8x1xi32>
    %9 = vector.broadcast %8 : vector<8x1xi32> to vector<8x128xi32>
    %10 = arith.cmpi eq, %1, %9 : vector<8x128xi32>
    %11 = arith.extui %10 : vector<8x128xi1> to vector<8x128xi32>
    %12 = arith.sitofp %11 : vector<8x128xi32> to vector<8x128xf32>
    %13 = arith.truncf %12 : vector<8x128xf32> to vector<8x128xbf16>
    %14 = vector.extract_strided_slice %0 {offsets = [0, 2], sizes = [8, 1], strides = [1, 1]} : vector<8x3xi32> to vector<8x1xi32>
    %15 = vector.broadcast %14 : vector<8x1xi32> to vector<8x128xi32>
    %16 = arith.cmpi eq, %1, %15 : vector<8x128xi32>
    %17 = arith.extui %16 : vector<8x128xi1> to vector<8x128xi32>
    %18 = arith.sitofp %17 : vector<8x128xi32> to vector<8x128xf32>
    %19 = arith.truncf %18 : vector<8x128xf32> to vector<8x128xbf16>
    %20 = tpu.concatenate %7, %13, %19 in 1 : vector<8x128xbf16>, vector<8x128xbf16>, vector<8x128xbf16> -> vector<8x384xbf16>
    %c0_1 = arith.constant 0 : index
    %c0_2 = arith.constant 0 : index
    %21 = vector.load %arg2[%c0_1, %c0_2] : memref<384x128xbf16, #tpu.memory_space<vmem>>, vector<384x128xbf16>
    %cst = arith.constant dense<0.000000e+00> : vector<8x128xf32>
    %22 = tpu.matmul %20, %21, %cst {dimension_numbers = #tpu.dot_dimension_numbers<[1], [0], [0], [1], [0, 0, 1, 1], [], []>} : vector<8x384xbf16>, vector<384x128xbf16>, vector<8x128xf32> -> vector<8x128xf32>
    %c0_3 = arith.constant 0 : index
    %c0_4 = arith.constant 0 : index
    %23 = vector.load %arg3[%c0_3, %c0_4] : memref<1x128xf32, #tpu.memory_space<vmem>>, vector<1x128xf32>
    %24 = vector.broadcast %23 : vector<1x128xf32> to vector<8x128xf32>
    %25 = arith.addf %22, %24 : vector<8x128xf32>
    %26 = math.tanh %25 : vector<8x128xf32>
    %27 = arith.truncf %26 : vector<8x128xf32> to vector<8x128xbf16>
    %c0_5 = arith.constant 0 : index
    %c0_6 = arith.constant 0 : index
    %28 = vector.load %arg4[%c0_5, %c0_6] : memref<128x128xbf16, #tpu.memory_space<vmem>>, vector<128x128xbf16>
    %cst_7 = arith.constant dense<0.000000e+00> : vector<8x128xf32>
    %29 = tpu.matmul %27, %28, %cst_7 {dimension_numbers = #tpu.dot_dimension_numbers<[1], [0], [0], [1], [0, 0, 1, 1], [], []>} : vector<8x128xbf16>, vector<128x128xbf16>, vector<8x128xf32> -> vector<8x128xf32>
    %c0_8 = arith.constant 0 : index
    %c0_9 = arith.constant 0 : index
    %30 = vector.load %arg5[%c0_8, %c0_9] : memref<1x128xf32, #tpu.memory_space<vmem>>, vector<1x128xf32>
    %31 = vector.broadcast %30 : vector<1x128xf32> to vector<8x128xf32>
    %32 = arith.addf %29, %31 : vector<8x128xf32>
    %c0_10 = arith.constant 0 : index
    %c0_11 = arith.constant 0 : index
    %33 = vector.load %arg6[%c0_10, %c0_11] : memref<8x128xf32, #tpu.memory_space<vmem>>, vector<8x128xf32>
    tpu.vector_store %arg6[%c0_10, %c0_11], %32 {strides = array<i32>} : memref<8x128xf32, #tpu.memory_space<vmem>>, vector<8x128xf32>,
    return
  }
  func.func @transform_0(%arg0: i32) -> (i32, i32) {
    %c0_i32 = arith.constant 0 : i32
    %c0_i32_0 = arith.constant 0 : i32
    return %arg0, %c0_i32 : i32, i32
  }
  func.func @transform_1(%arg0: i32) -> (i32, i32) {
    %c0_i32 = arith.constant 0 : i32
    %c0_i32_0 = arith.constant 0 : i32
    %c0_i32_1 = arith.constant 0 : i32
    return %c0_i32, %c0_i32_0 : i32, i32
  }
  func.func @transform_2(%arg0: i32) -> (i32, i32) {
    %c0_i32 = arith.constant 0 : i32
    %c0_i32_0 = arith.constant 0 : i32
    %c0_i32_1 = arith.constant 0 : i32
    return %c0_i32, %c0_i32_0 : i32, i32
  }
  func.func @transform_3(%arg0: i32) -> (i32, i32) {
    %c0_i32 = arith.constant 0 : i32
    %c0_i32_0 = arith.constant 0 : i32
    %c0_i32_1 = arith.constant 0 : i32
    return %c0_i32, %c0_i32_0 : i32, i32
  }
  func.func @transform_4(%arg0: i32) -> (i32, i32) {
    %c0_i32 = arith.constant 0 : i32
    %c0_i32_0 = arith.constant 0 : i32
    %c0_i32_1 = arith.constant 0 : i32
    return %c0_i32, %c0_i32_0 : i32, i32
  }
  func.func @transform_5(%arg0: i32) -> (i32, i32) {
    %c0_i32 = arith.constant 0 : i32
    %c0_i32_0 = arith.constant 0 : i32
    return %arg0, %c0_i32 : i32, i32
  }
}

</mosaic_0001>

<llo_original>
// kernel: mlp_forward.1
$region0: #{mlp_forward.1}
  #allocation0 [shape = 'u32[]', space=smem, size = 0x4, offset = 0x4, fixed_abs, tag = 'smem constant byte address 0x4 - core index']
  #allocation1 [shape = 'u32[144,128]{1,0:T(1,128)}', space=vmem, size = 0x12000, scoped, tag = 'internal scratch']
  %s0 = inlined_call_operand.vmem [shape: s32[8,3], index: 0, kind: input, shape index: {}]
  %s1 = inlined_call_operand.vmem [shape: bf16[384,128], index: 1, kind: input, shape index: {}]
  %s2 = inlined_call_operand.vmem [shape: f32[1,128], index: 2, kind: input, shape index: {}]
  %s3 = inlined_call_operand.vmem [shape: bf16[128,128], index: 3, kind: input, shape index: {}]
  %s4 = inlined_call_operand.vmem [shape: f32[1,128], index: 4, kind: input, shape index: {}]
  %s5 = inlined_call_operand.hbm [shape: f32[8,128], index: 5, kind: output, shape index: {}]
  %s6 = sld [smem:[#allocation0]]
  $region30: #{mlp_forward.1} parent=0
    _
  %s8 = ssub.s32 1, %s6
  %s9 = scalar_select 0, %s8, %s6
  $region1: #{mlp_forward.1} parent=0
    #allocation2 [shape = 'u8[4096]{0}', space=vmem, size = 0x1000, scoped, tag = 'output window, operand 0, single buffered']
    #allocation3 [shape = 's32[1]{0}', space=sflag, size = 0x4, scoped, tag = 'scoped memory for mlp_forward.1']
    %10 = vsyncpa [#allocation3], 0
    // Predicated region
    $region2: #{mlp_forward.1} parent=1 // pred_check
      _
    $region3: #{mlp_forward.1} parent=1 // pred_check_branch
      %12 = sbr.rel (0) target = $region5
    $region4: #{mlp_forward.1} parent=1 // pred_region
      _
    $region5: #{mlp_forward.1} parent=1 // pred_fallthru
      _
    // Predicated region
    $region6: #{mlp_forward.1} parent=1 // pred_check
      _
    $region7: #{mlp_forward.1} parent=1 // pred_check_branch
      %14 = sbr.rel (0) target = $region9
    $region8: #{mlp_forward.1} parent=1 // pred_region
      _
    $region9: #{mlp_forward.1} parent=1 // pred_fallthru
      _
    // Predicated region
    $region10: #{mlp_forward.1} parent=1 // pred_check
      _
    $region11: #{mlp_forward.1} parent=1 // pred_check_branch
      %16 = sbr.rel (0) target = $region13
    $region12: #{mlp_forward.1} parent=1 // pred_region
      _
    $region13: #{mlp_forward.1} parent=1 // pred_fallthru
      _
    // Predicated region
    $region14: #{mlp_forward.1} parent=1 // pred_check
      _
    $region15: #{mlp_forward.1} parent=1 // pred_check_branch
      %18 = sbr.rel (0) target = $region17
    $region16: #{mlp_forward.1} parent=1 // pred_region
      _
    $region17: #{mlp_forward.1} parent=1 // pred_fallthru
      _
    // Predicated region
    $region18: #{mlp_forward.1} parent=1 // pred_check
      _
    $region19: #{mlp_forward.1} parent=1 // pred_check_branch
      %20 = sbr.rel (0) target = $region21
    $region20: #{mlp_forward.1} parent=1 // pred_region
      _
    $region21: #{mlp_forward.1} parent=1 // pred_fallthru
      _
    %v22 = vld [vmem:[%s0] sm:$0xff]
    %v23 = vlaneseq
    %v24 = vand.u32 %v23, 127
    %25 = vset.pattern.permute.xlu0 0
    %26 = vperm.xlu0 %25, %v22
    %v27 = vpop.permute.xlu0 %26
    %vm28 = vcmp.eq.s32.totalorder %v24, %v27
    %v29 = vsel %vm28, 1, 0
    %v30 = vcvt.s32.f32 %v29
    %v31 = vpack.c.bf16 %v30, %v30
    %32 = vset.pattern.permute.xlu0 1
    %33 = vperm.xlu0 %32, %v22
    %v34 = vpop.permute.xlu0 %33
    %vm35 = vcmp.eq.s32.totalorder %v24, %v34
    %v36 = vsel %vm35, 1, 0
    %v37 = vcvt.s32.f32 %v36
    %v38 = vpack.c.bf16 %v37, %v37
    %39 = vset.pattern.permute.xlu0 2
    %40 = vperm.xlu0 %39, %v22
    %v41 = vpop.permute.xlu0 %40
    %vm42 = vcmp.eq.s32.totalorder %v24, %v41
    %v43 = vsel %vm42, 1, 0
    %v44 = vcvt.s32.f32 %v43
    %v45 = vpack.c.bf16 %v44, %v44
    %v46 = vld [vmem:[%s1] sm:$0xf]
    %v47 = vld [vmem:[%s1 + $0x4] sm:$0xf]
    %v48 = vld [vmem:[%s1 + $0x8] sm:$0xf]
    %v49 = vld [vmem:[%s1 + $0xc] sm:$0xf]
    %v50 = vld [vmem:[%s1 + $0x10] sm:$0xf]
    %v51 = vld [vmem:[%s1 + $0x14] sm:$0xf]
    %v52 = vld [vmem:[%s1 + $0x18] sm:$0xf]
    %v53 = vld [vmem:[%s1 + $0x1c] sm:$0xf]
    %v54 = vld [vmem:[%s1 + $0x20] sm:$0xf]
    %v55 = vld [vmem:[%s1 + $0x24] sm:$0xf]
    %v56 = vld [vmem:[%s1 + $0x28] sm:$0xf]
    %v57 = vld [vmem:[%s1 + $0x2c] sm:$0xf]
    %v58 = vld [vmem:[%s1 + $0x30] sm:$0xf]
    %v59 = vld [vmem:[%s1 + $0x34] sm:$0xf]
    %v60 = vld [vmem:[%s1 + $0x38] sm:$0xf]
    %v61 = vld [vmem:[%s1 + $0x3c] sm:$0xf]
    %v62 = vld [vmem:[%s1 + $0x40] sm:$0xf]
    %v63 = vld [vmem:[%s1 + $0x44] sm:$0xf]
    %v64 = vld [vmem:[%s1 + $0x48] sm:$0xf]
    %v65 = vld [vmem:[%s1 + $0x4c] sm:$0xf]
    %v66 = vld [vmem:[%s1 + $0x50] sm:$0xf]
    %v67 = vld [vmem:[%s1 + $0x54] sm:$0xf]
    %v68 = vld [vmem:[%s1 + $0x58] sm:$0xf]
    %v69 = vld [vmem:[%s1 + $0x5c] sm:$0xf]
    %v70 = vld [vmem:[%s1 + $0x60] sm:$0xf]
    %v71 = vld [vmem:[%s1 + $0x64] sm:$0xf]
    %v72 = vld [vmem:[%s1 + $0x68] sm:$0xf]
    %v73 = vld [vmem:[%s1 + $0x6c] sm:$0xf]
    %v74 = vld [vmem:[%s1 + $0x70] sm:$0xf]
    %v75 = vld [vmem:[%s1 + $0x74] sm:$0xf]
    %v76 = vld [vmem:[%s1 + $0x78] sm:$0xf]
    %v77 = vld [vmem:[%s1 + $0x7c] sm:$0xf]
    %v78 = vld [vmem:[%s1 + $0x80] sm:$0xf]
    %v79 = vld [vmem:[%s1 + $0x84] sm:$0xf]
    %v80 = vld [vmem:[%s1 + $0x88] sm:$0xf]
    %v81 = vld [vmem:[%s1 + $0x8c] sm:$0xf]
    %v82 = vld [vmem:[%s1 + $0x90] sm:$0xf]
    %v83 = vld [vmem:[%s1 + $0x94] sm:$0xf]
    %v84 = vld [vmem:[%s1 + $0x98] sm:$0xf]
    %v85 = vld [vmem:[%s1 + $0x9c] sm:$0xf]
    %v86 = vld [vmem:[%s1 + $0xa0] sm:$0xf]
    %v87 = vld [vmem:[%s1 + $0xa4] sm:$0xf]
    %v88 = vld [vmem:[%s1 + $0xa8] sm:$0xf]
    %v89 = vld [vmem:[%s1 + $0xac] sm:$0xf]
    %v90 = vld [vmem:[%s1 + $0xb0] sm:$0xf]
    %v91 = vld [vmem:[%s1 + $0xb4] sm:$0xf]
    %v92 = vld [vmem:[%s1 + $0xb8] sm:$0xf]
    %v93 = vld [vmem:[%s1 + $0xbc] sm:$0xf]
    %v94 = vld [vmem:[%s2] sm:$0x1]
    %v96 = vlaneseq
    %v97 = vshrl.u32 %v96, 7
    %v98 = vsub.s32 0, %v97
    %v99 = vrot.slane %v94, %v98
    %v149 = vunpack.c.l.b16 %v46
    %v150 = vunpack.c.l.b16 %v47
    %v151 = vunpack.c.l.b16 %v48
    %v152 = vunpack.c.l.b16 %v49
    %v153 = vunpack.c.l.b16 %v50
    %v154 = vunpack.c.l.b16 %v51
    %v155 = vunpack.c.l.b16 %v52
    %v156 = vunpack.c.l.b16 %v53
    %v157 = vunpack.c.l.b16 %v54
    %v158 = vunpack.c.l.b16 %v55
    %v159 = vunpack.c.l.b16 %v56
    %v160 = vunpack.c.l.b16 %v57
    %v161 = vunpack.c.l.b16 %v58
    %v162 = vunpack.c.l.b16 %v59
    %v163 = vunpack.c.l.b16 %v60
    %v164 = vunpack.c.l.b16 %v61
    %v165 = vunpack.c.l.b16 %v62
    %v166 = vunpack.c.l.b16 %v63
    %v167 = vunpack.c.l.b16 %v64
    %v168 = vunpack.c.l.b16 %v65
    %v169 = vunpack.c.l.b16 %v66
    %v170 = vunpack.c.l.b16 %v67
    %v171 = vunpack.c.l.b16 %v68
    %v172 = vunpack.c.l.b16 %v69
    %v173 = vunpack.c.l.b16 %v70
    %v174 = vunpack.c.l.b16 %v71
    %v175 = vunpack.c.l.b16 %v72
    %v176 = vunpack.c.l.b16 %v73
    %v177 = vunpack.c.l.b16 %v74
    %v178 = vunpack.c.l.b16 %v75
    %v179 = vunpack.c.l.b16 %v76
    %v180 = vunpack.c.l.b16 %v77
    %v181 = vunpack.c.l.b16 %v78
    %v182 = vunpack.c.l.b16 %v79
    %v183 = vunpack.c.l.b16 %v80
    %v184 = vunpack.c.l.b16 %v81
    %v185 = vunpack.c.l.b16 %v82
    %v186 = vunpack.c.l.b16 %v83
    %v187 = vunpack.c.l.b16 %v84
    %v188 = vunpack.c.l.b16 %v85
    %v189 = vunpack.c.l.b16 %v86
    %v190 = vunpack.c.l.b16 %v87
    %v191 = vunpack.c.l.b16 %v88
    %v192 = vunpack.c.l.b16 %v89
    %v193 = vunpack.c.l.b16 %v90
    %v194 = vunpack.c.l.b16 %v91
    %v195 = vunpack.c.l.b16 %v92
    %v196 = vunpack.c.l.b16 %v93
    %v197 = vpack.c.b16 %v150, %v149
    %v198 = vpack.c.b16 %v152, %v151
    %v199 = vpack.c.b16 %v154, %v153
    %v200 = vpack.c.b16 %v156, %v155
    %v201 = vpack.c.b16 %v158, %v157
    %v202 = vpack.c.b16 %v160, %v159
    %v203 = vpack.c.b16 %v162, %v161
    %v204 = vpack.c.b16 %v164, %v163
    %v205 = vpack.c.b16 %v166, %v165
    %v206 = vpack.c.b16 %v168, %v167
    %v207 = vpack.c.b16 %v170, %v169
    %v208 = vpack.c.b16 %v172, %v171
    %v209 = vpack.c.b16 %v174, %v173
    %v210 = vpack.c.b16 %v176, %v175
    %v211 = vpack.c.b16 %v178, %v177
    %v212 = vpack.c.b16 %v180, %v179
    %v213 = vpack.c.b16 %v182, %v181
    %v214 = vpack.c.b16 %v184, %v183
    %v215 = vpack.c.b16 %v186, %v185
    %v216 = vpack.c.b16 %v188, %v187
    %v217 = vpack.c.b16 %v190, %v189
    %v218 = vpack.c.b16 %v192, %v191
    %v219 = vpack.c.b16 %v194, %v193
    %v220 = vpack.c.b16 %v196, %v195
    %245 = vmatprep.subr.bf16.mxu0 0
    %246 = vmatpush1.bf16.msra.mxu0 %v197
    %247 = vmatprep.subr.bf16.mxu0 0
    %248 = vmatpush1.bf16.msra.mxu0 %v198
    %249 = vmatprep.subr.bf16.mxu0 0
    %250 = vmatpush1.bf16.msra.mxu0 %v199
    %251 = vmatprep.subr.bf16.mxu0 0
    %252 = vmatpush1.bf16.msra.mxu0 %v200
    %253 = vmatprep.subr.bf16.mxu0 0
    %254 = vmatpush1.bf16.msra.mxu0 %v201
    %255 = vmatprep.subr.bf16.mxu0 0
    %256 = vmatpush1.bf16.msra.mxu0 %v202
    %257 = vmatprep.subr.bf16.mxu0 0
    %258 = vmatpush1.bf16.msra.mxu0 %v203
    %259 = vmatprep.subr.bf16.mxu0 0
    %260 = vmatpush1.bf16.msra.mxu0 %v204
    %261 = vmatprep.subr.bf16.mxu0 0
    %262 = vmatpush1.bf16.msra.mxu0 %v205
    %263 = vmatprep.subr.bf16.mxu0 0
    %264 = vmatpush1.bf16.msra.mxu0 %v206
    %265 = vmatprep.subr.bf16.mxu0 0
    %266 = vmatpush1.bf16.msra.mxu0 %v207
    %267 = vmatprep.subr.bf16.mxu0 0
    %268 = vmatpush1.bf16.msra.mxu0 %v208
    %269 = vmatprep.subr.bf16.mxu0 0
    %270 = vmatpush1.bf16.msra.mxu0 %v209
    %271 = vmatprep.subr.bf16.mxu0 0
    %272 = vmatpush1.bf16.msra.mxu0 %v210
    %273 = vmatprep.subr.bf16.mxu0 0
    %274 = vmatpush1.bf16.msra.mxu0 %v211
    %275 = vmatprep.subr.bf16.mxu0 0
    %276 = vmatpush1.bf16.msra.mxu0 %v212
    %277 = vmatprep.mubr.bf16.mxu0 %v38
    %278 = vmatmul.mubr.bf16.gmra.mrb[0].mxu0 %v31
    %v279 = vpop.f32.mrb[0].mxu0
    %v280 = vadd.f32 %v99, %v279
    %v281 = vpop.f32.mrb[0].mxu0
    %v282 = vpop.f32.mrb[0].mxu0
    %v283 = vpop.f32.mrb[0].mxu0
    %284 = vdwg.mxu0
    %285 = vmatprep.subr.bf16.mxu0 0
    %286 = vmatpush1.bf16.msra.mxu0 %v213
    %287 = vmatprep.subr.bf16.mxu0 0
    %288 = vmatpush1.bf16.msra.mxu0 %v214
    %289 = vmatprep.subr.bf16.mxu0 0
    %290 = vmatpush1.bf16.msra.mxu0 %v215
    %291 = vmatprep.subr.bf16.mxu0 0
    %292 = vmatpush1.bf16.msra.mxu0 %v216
    %293 = vmatprep.subr.bf16.mxu0 0
    %294 = vmatpush1.bf16.msra.mxu0 %v217
    %295 = vmatprep.subr.bf16.mxu0 0
    %296 = vmatpush1.bf16.msra.mxu0 %v218
    %297 = vmatprep.subr.bf16.mxu0 0
    %298 = vmatpush1.bf16.msra.mxu0 %v219
    %299 = vmatprep.subr.bf16.mxu0 0
    %300 = vmatpush1.bf16.msra.mxu0 %v220
    %301 = vmatprep.subr.bf16.mxu0 0
    %302 = vmatpush1.bf16.msra.mxu0 0
    %303 = vmatprep.subr.bf16.mxu0 0
    %304 = vmatpush1.bf16.msra.mxu0 0
    %305 = vmatprep.subr.bf16.mxu0 0
    %306 = vmatpush1.bf16.msra.mxu0 0
    %307 = vmatprep.subr.bf16.mxu0 0
    %308 = vmatpush1.bf16.msra.mxu0 0
    %309 = vmatprep.subr.bf16.mxu0 0
    %310 = vmatpush1.bf16.msra.mxu0 0
    %311 = vmatprep.subr.bf16.mxu0 0
    %312 = vmatpush1.bf16.msra.mxu0 0
    %313 = vmatprep.subr.bf16.mxu0 0
    %314 = vmatpush1.bf16.msra.mxu0 0
    %315 = vmatprep.subr.bf16.mxu0 0
    %316 = vmatpush1.bf16.msra.mxu0 0
    %317 = vmatprep.mubr.bf16.mxu0 0
    %318 = vmatmul.mubr.bf16.gmra.mrb[0].mxu0 %v45
    %v319 = vpop.f32.mrb[0].mxu0
    %v320 = vadd.f32 %v280, %v319
    %v321 = vpop.f32.mrb[0].mxu0
    %v322 = vpop.f32.mrb[0].mxu0
    %v323 = vpop.f32.mrb[0].mxu0
    %324 = vdwg.mxu0
    %v325 = vtanh.pop %v320
    %v326 = vpack.c.bf16 %v325, %v325
    %v327 = vld [vmem:[%s3] sm:$0xf]
    %v328 = vld [vmem:[%s3 + $0x4] sm:$0xf]
    %v329 = vld [vmem:[%s3 + $0x8] sm:$0xf]
    %v330 = vld [vmem:[%s3 + $0xc] sm:$0xf]
    %v331 = vld [vmem:[%s3 + $0x10] sm:$0xf]
    %v332 = vld [vmem:[%s3 + $0x14] sm:$0xf]
    %v333 = vld [vmem:[%s3 + $0x18] sm:$0xf]
    %v334 = vld [vmem:[%s3 + $0x1c] sm:$0xf]
    %v335 = vld [vmem:[%s3 + $0x20] sm:$0xf]
    %v336 = vld [vmem:[%s3 + $0x24] sm:$0xf]
    %v337 = vld [vmem:[%s3 + $0x28] sm:$0xf]
    %v338 = vld [vmem:[%s3 + $0x2c] sm:$0xf]
    %v339 = vld [vmem:[%s3 + $0x30] sm:$0xf]
    %v340 = vld [vmem:[%s3 + $0x34] sm:$0xf]
    %v341 = vld [vmem:[%s3 + $0x38] sm:$0xf]
    %v342 = vld [vmem:[%s3 + $0x3c] sm:$0xf]
    %v343 = vld [vmem:[%s4] sm:$0x1]
    %v345 = vlaneseq
    %v346 = vshrl.u32 %v345, 7
    %v347 = vsub.s32 0, %v346
    %v348 = vrot.slane %v343, %v347
    %v366 = vunpack.c.l.b16 %v327
    %v367 = vunpack.c.l.b16 %v328
    %v368 = vunpack.c.l.b16 %v329
    %v369 = vunpack.c.l.b16 %v330
    %v370 = vunpack.c.l.b16 %v331
    %v371 = vunpack.c.l.b16 %v332
    %v372 = vunpack.c.l.b16 %v333
    %v373 = vunpack.c.l.b16 %v334
    %v374 = vunpack.c.l.b16 %v335
    %v375 = vunpack.c.l.b16 %v336
    %v376 = vunpack.c.l.b16 %v337
    %v377 = vunpack.c.l.b16 %v338
    %v378 = vunpack.c.l.b16 %v339
    %v379 = vunpack.c.l.b16 %v340
    %v380 = vunpack.c.l.b16 %v341
    %v381 = vunpack.c.l.b16 %v342
    %v382 = vpack.c.b16 %v367, %v366
    %v383 = vpack.c.b16 %v369, %v368
    %v384 = vpack.c.b16 %v371, %v370
    %v385 = vpack.c.b16 %v373, %v372
    %v386 = vpack.c.b16 %v375, %v374
    %v387 = vpack.c.b16 %v377, %v376
    %v388 = vpack.c.b16 %v379, %v378
    %v389 = vpack.c.b16 %v381, %v380
    %398 = vmatprep.subr.bf16.mxu0 0
    %399 = vmatpush1.bf16.msra.mxu0 %v382
    %400 = vmatprep.subr.bf16.mxu0 0
    %401 = vmatpush1.bf16.msra.mxu0 %v383
    %402 = vmatprep.subr.bf16.mxu0 0
    %403 = vmatpush1.bf16.msra.mxu0 %v384
    %404 = vmatprep.subr.bf16.mxu0 0
    %405 = vmatpush1.bf16.msra.mxu0 %v385
    %406 = vmatprep.subr.bf16.mxu0 0
    %407 = vmatpush1.bf16.msra.mxu0 %v386
    %408 = vmatprep.subr.bf16.mxu0 0
    %409 = vmatpush1.bf16.msra.mxu0 %v387
    %410 = vmatprep.subr.bf16.mxu0 0
    %411 = vmatpush1.bf16.msra.mxu0 %v388
    %412 = vmatprep.subr.bf16.mxu0 0
    %413 = vmatpush1.bf16.msra.mxu0 %v389
    %414 = vmatprep.subr.bf16.mxu0 0
    %415 = vmatpush1.bf16.msra.mxu0 0
    %416 = vmatprep.subr.bf16.mxu0 0
    %417 = vmatpush1.bf16.msra.mxu0 0
    %418 = vmatprep.subr.bf16.mxu0 0
    %419 = vmatpush1.bf16.msra.mxu0 0
    %420 = vmatprep.subr.bf16.mxu0 0
    %421 = vmatpush1.bf16.msra.mxu0 0
    %422 = vmatprep.subr.bf16.mxu0 0
    %423 = vmatpush1.bf16.msra.mxu0 0
    %424 = vmatprep.subr.bf16.mxu0 0
    %425 = vmatpush1.bf16.msra.mxu0 0
    %426 = vmatprep.subr.bf16.mxu0 0
    %427 = vmatpush1.bf16.msra.mxu0 0
    %428 = vmatprep.subr.bf16.mxu0 0
    %429 = vmatpush1.bf16.msra.mxu0 0
    %430 = vmatprep.mubr.bf16.mxu0 0
    %431 = vmatmul.mubr.bf16.gmra.mrb[0].mxu0 %v326
    %v432 = vpop.f32.mrb[0].mxu0
    %v433 = vadd.f32 %v348, %v432
    %v434 = vpop.f32.mrb[0].mxu0
    %v435 = vpop.f32.mrb[0].mxu0
    %v436 = vpop.f32.mrb[0].mxu0
    %437 = vdwg.mxu0
    %438 = vst [vmem:[#allocation2] sm:$0xff] %v433
    // Predicated region
    $region22: #{mlp_forward.1} parent=1 // pred_check
      _
    $region23: #{mlp_forward.1} parent=1 // pred_check_branch
      %440 = sbr.rel (0) target = $region25
    $region24: #{mlp_forward.1} parent=1 // pred_region
      %s442 = ssub.s32 128, 128
      %443 = vsyncadd [#allocation3], %s442
      %s445 = sshll.u32 [#allocation2], 4
      %s446 = int_to_ptr.vmem [resolvable:$true] %s445
      %448 = dma.vmem_to_hbm [thread:$0]  %s446, 128, %s5, [#allocation3]
    $region25: #{mlp_forward.1} parent=1 // pred_fallthru
      _
    // Predicated region
    $region26: #{mlp_forward.1} parent=1 // pred_check
      _
    $region27: #{mlp_forward.1} parent=1 // pred_check_branch
      %450 = sbr.rel (0) target = $region29
    $region28: #{mlp_forward.1} parent=1 // pred_region
      %451 = dma.done [#allocation3], 128
    $region29: #{mlp_forward.1} parent=1 // pred_fallthru
      _
    %452 = vsyncpa [#allocation3], 1

</llo_original>
